<compile_context>
chip_gen: v7x
topology: tpu7x:2x2x1
jax: 0.10.0
libtpu: 0.0.40
codegen_flags: <defaults>
</compile_context>

<pallas_src>
import jax
import jax.numpy as jnp
from jax.experimental import pallas as pl
from jax.experimental.pallas import tpu as pltpu

MATRIX_SIZE = 8
INPUT_DIM = MATRIX_SIZE * MATRIX_SIZE + 4      # 68
OUTPUT_DIM = MATRIX_SIZE * MATRIX_SIZE + 1     # 65
HIDDEN1 = 128                                  # FIRST_HIDDEN_NEURONS
HIDDEN2 = 64                                   # SECOND_HIDDEN_NEURONS


def _round_up(n, m):
    return ((n + m - 1) // m) * m


def qnet_kernel(x_ref, w1_ref, b1_ref, w2_ref, b2_ref, w3_ref, b3_ref, o_ref):
    # x tile: (tb, 68). Weights bf16 (MXU inputs), biases f32. Accumulate in f32.
    x = x_ref[...].astype(jnp.bfloat16)

    # fc1 + ReLU (f32 bias add / ReLU on the VPU)
    h1 = jnp.dot(x, w1_ref[...], preferred_element_type=jnp.float32) + b1_ref[...]
    h1 = jnp.maximum(h1, 0.0)

    # fc2 + ReLU
    h2 = jnp.dot(h1.astype(jnp.bfloat16), w2_ref[...],
                 preferred_element_type=jnp.float32) + b2_ref[...]
    h2 = jnp.maximum(h2, 0.0)

    # out (no activation) — stored at its true 65-lane width (masked vst is fine:
    # the kernel is HBM-DMA bound, not store-slot bound).
    y = jnp.dot(h2.astype(jnp.bfloat16), w3_ref[...],
                preferred_element_type=jnp.float32) + b3_ref[...]
    o_ref[...] = y.astype(o_ref.dtype)


def _prepare_params(params):
    """Cast weights to bf16 (one-time, tiny) and shape biases as (1, N) f32."""
    w1, b1, w2, b2, w3, b3 = params
    return (jnp.asarray(w1, jnp.bfloat16),
            jnp.asarray(b1, jnp.float32).reshape(1, HIDDEN1),
            jnp.asarray(w2, jnp.bfloat16),
            jnp.asarray(b2, jnp.float32).reshape(1, HIDDEN2),
            jnp.asarray(w3, jnp.bfloat16),
            jnp.asarray(b3, jnp.float32).reshape(1, OUTPUT_DIM))


def qnetwork_forward(x, params, tb=1024):
    """x: [B, INPUT_DIM] (f32 or bf16) -> [B, OUTPUT_DIM] in x.dtype."""
    B, in_dim = x.shape
    assert in_dim == INPUT_DIM, in_dim
    w1p, b1p, w2p, b2p, w3p, b3p = _prepare_params(params)

    # Batch tile: multiple of 8 (f32 sublane), capped by the batch itself.
    tb = max(8, min(tb, _round_up(B, 8)))
    grid = (pl.cdiv(B, tb),)

    out = pl.pallas_call(
        qnet_kernel,
        out_shape=jax.ShapeDtypeStruct((B, OUTPUT_DIM), x.dtype),
        grid_spec=pltpu.PrefetchScalarGridSpec(
            num_scalar_prefetch=0,
            grid=grid,
            in_specs=[
                pl.BlockSpec((tb, INPUT_DIM), lambda i: (i, 0)),        # x: streamed over batch
                pl.BlockSpec((INPUT_DIM, HIDDEN1), lambda i: (0, 0)),   # w1: VMEM-resident
                pl.BlockSpec((1, HIDDEN1), lambda i: (0, 0)),           # b1
                pl.BlockSpec((HIDDEN1, HIDDEN2), lambda i: (0, 0)),     # w2
                pl.BlockSpec((1, HIDDEN2), lambda i: (0, 0)),           # b2
                pl.BlockSpec((HIDDEN2, OUTPUT_DIM), lambda i: (0, 0)),  # w3
                pl.BlockSpec((1, OUTPUT_DIM), lambda i: (0, 0)),        # b3
            ],
            out_specs=pl.BlockSpec((tb, OUTPUT_DIM), lambda i: (i, 0)),
        ),
        compiler_params=pltpu.CompilerParams(
            dimension_semantics=("parallel",)),  # megacore sharding on v7x
    )(x, w1p, b1p, w2p, b2p, w3p, b3p)

    return out


def init_params(key):
    """Deterministic init mimicking PyTorch nn.Linear default (uniform +-1/sqrt(fan_in)).
    Weights stored as [in_features, out_features] so the kernel computes x @ W + b."""
    def linear(key, fan_in, fan_out):
        kw, kb = jax.random.split(key)
        bound = 1.0 / jnp.sqrt(fan_in)
        w = jax.random.uniform(kw, (fan_in, fan_out), jnp.float32, -bound, bound)
        b = jax.random.uniform(kb, (1, fan_out), jnp.float32, -bound, bound)
        return w, b

    k1, k2, k3 = jax.random.split(key, 3)
    w1, b1 = linear(k1, INPUT_DIM, HIDDEN1)
    w2, b2 = linear(k2, HIDDEN1, HIDDEN2)
    w3, b3 = linear(k3, HIDDEN2, OUTPUT_DIM)
    return (w1, b1, w2, b2, w3, b3)


def reference_forward(x, params):
    """Pure-f32 JAX reference matching the PyTorch forward."""
    w1, b1, w2, b2, w3, b3 = params
    h1 = jnp.maximum(x @ w1 + b1, 0.0)
    h2 = jnp.maximum(h1 @ w2 + b2, 0.0)
    return h2 @ w3 + b3


if __name__ == "__main__":
    key = jax.random.PRNGKey(0)
    kx, kx2, kp = jax.random.split(key, 3)
    params = init_params(kp)

    # Small, tile-aligned batch.
    batch = 8
    x = jax.random.normal(kx, (batch, INPUT_DIM), jnp.float32)
    out = jax.block_until_ready(qnetwork_forward(x, params))
    ref = reference_forward(x, params)
    assert out.shape == (batch, OUTPUT_DIM), out.shape
    # bf16 MXU inputs with f32 accumulation -> bf16-appropriate tolerance vs f32 ref.
    assert jnp.allclose(out, ref, atol=5e-2, rtol=5e-2), "mismatch vs reference (B=8)"

    # Non-multiple-of-8 batch exercises the unpadded partial-block path.
    batch2 = 13
    x2 = jax.random.normal(kx2, (batch2, INPUT_DIM), jnp.float32)
    out2 = jax.block_until_ready(qnetwork_forward(x2, params))
    ref2 = reference_forward(x2, params)
    assert out2.shape == (batch2, OUTPUT_DIM), out2.shape
    assert jnp.allclose(out2, ref2, atol=5e-2, rtol=5e-2), "mismatch vs reference (B=13)"

    print("KERNEL_OK")
</pallas_src>

<mosaic_0001>
module attributes {stable_mosaic.version = 11 : i64} {
  func.func @qnet_kernel(%arg0: i32, %arg1: memref<8x68xf32, #tpu.memory_space<vmem>>, %arg2: memref<68x128xbf16, #tpu.memory_space<vmem>>, %arg3: memref<1x128xf32, #tpu.memory_space<vmem>>, %arg4: memref<128x64xbf16, #tpu.memory_space<vmem>>, %arg5: memref<1x64xf32, #tpu.memory_space<vmem>>, %arg6: memref<64x65xbf16, #tpu.memory_space<vmem>>, %arg7: memref<1x65xf32, #tpu.memory_space<vmem>>, %arg8: memref<8x65xf32, #tpu.memory_space<vmem>>) attributes {dimension_semantics = [#tpu.dimension_semantics<parallel>], iteration_bounds = array<i64: 1>, scalar_prefetch = 0 : i64, scratch_operands = 0 : i64, tpu.core_type = #tpu.core_type<tc>, window_params = [{transform_indices = @transform_0, window_bounds = array<i64: 8, 68>}, {pipeline_mode = #tpu.pipeline_mode<synchronous>, transform_indices = @transform_1, window_bounds = array<i64: 68, 128>}, {pipeline_mode = #tpu.pipeline_mode<synchronous>, transform_indices = @transform_2, window_bounds = array<i64: 1, 128>}, {pipeline_mode = #tpu.pipeline_mode<synchronous>, transform_indices = @transform_3, window_bounds = array<i64: 128, 64>}, {pipeline_mode = #tpu.pipeline_mode<synchronous>, transform_indices = @transform_4, window_bounds = array<i64: 1, 64>}, {pipeline_mode = #tpu.pipeline_mode<synchronous>, transform_indices = @transform_5, window_bounds = array<i64: 64, 65>}, {pipeline_mode = #tpu.pipeline_mode<synchronous>, transform_indices = @transform_6, window_bounds = array<i64: 1, 65>}, {transform_indices = @transform_7, window_bounds = array<i64: 8, 65>}]} {
    %c0 = arith.constant 0 : index
    %c0_0 = arith.constant 0 : index
    %0 = vector.load %arg1[%c0, %c0_0] : memref<8x68xf32, #tpu.memory_space<vmem>>, vector<8x68xf32>
    %1 = arith.truncf %0 : vector<8x68xf32> to vector<8x68xbf16>
    %c0_1 = arith.constant 0 : index
    %c0_2 = arith.constant 0 : index
    %2 = vector.load %arg2[%c0_1, %c0_2] : memref<68x128xbf16, #tpu.memory_space<vmem>>, vector<68x128xbf16>
    %cst = arith.constant dense<0.000000e+00> : vector<8x128xf32>
    %3 = tpu.matmul %1, %2, %cst {dimension_numbers = #tpu.dot_dimension_numbers<[1], [0], [0], [1], [0, 0, 1, 1], [], []>} : vector<8x68xbf16>, vector<68x128xbf16>, vector<8x128xf32> -> vector<8x128xf32>
    %c0_3 = arith.constant 0 : index
    %c0_4 = arith.constant 0 : index
    %4 = vector.load %arg3[%c0_3, %c0_4] : memref<1x128xf32, #tpu.memory_space<vmem>>, vector<1x128xf32>
    %5 = vector.broadcast %4 : vector<1x128xf32> to vector<8x128xf32>
    %6 = arith.addf %3, %5 : vector<8x128xf32>
    %cst_5 = arith.constant 0.000000e+00 : f32
    %7 = vector.broadcast %cst_5 : f32 to vector<8x128xf32>
    %8 = arith.maximumf %6, %7 : vector<8x128xf32>
    %9 = arith.truncf %8 : vector<8x128xf32> to vector<8x128xbf16>
    %c0_6 = arith.constant 0 : index
    %c0_7 = arith.constant 0 : index
    %10 = vector.load %arg4[%c0_6, %c0_7] : memref<128x64xbf16, #tpu.memory_space<vmem>>, vector<128x64xbf16>
    %cst_8 = arith.constant dense<0.000000e+00> : vector<8x64xf32>
    %11 = tpu.matmul %9, %10, %cst_8 {dimension_numbers = #tpu.dot_dimension_numbers<[1], [0], [0], [1], [0, 0, 1, 1], [], []>} : vector<8x128xbf16>, vector<128x64xbf16>, vector<8x64xf32> -> vector<8x64xf32>
    %c0_9 = arith.constant 0 : index
    %c0_10 = arith.constant 0 : index
    %12 = vector.load %arg5[%c0_9, %c0_10] : memref<1x64xf32, #tpu.memory_space<vmem>>, vector<1x64xf32>
    %13 = vector.broadcast %12 : vector<1x64xf32> to vector<8x64xf32>
    %14 = arith.addf %11, %13 : vector<8x64xf32>
    %cst_11 = arith.constant 0.000000e+00 : f32
    %15 = vector.broadcast %cst_11 : f32 to vector<8x64xf32>
    %16 = arith.maximumf %14, %15 : vector<8x64xf32>
    %17 = arith.truncf %16 : vector<8x64xf32> to vector<8x64xbf16>
    %c0_12 = arith.constant 0 : index
    %c0_13 = arith.constant 0 : index
    %18 = vector.load %arg6[%c0_12, %c0_13] : memref<64x65xbf16, #tpu.memory_space<vmem>>, vector<64x65xbf16>
    %cst_14 = arith.constant dense<0.000000e+00> : vector<8x65xf32>
    %19 = tpu.matmul %17, %18, %cst_14 {dimension_numbers = #tpu.dot_dimension_numbers<[1], [0], [0], [1], [0, 0, 1, 1], [], []>} : vector<8x64xbf16>, vector<64x65xbf16>, vector<8x65xf32> -> vector<8x65xf32>
    %c0_15 = arith.constant 0 : index
    %c0_16 = arith.constant 0 : index
    %20 = vector.load %arg7[%c0_15, %c0_16] : memref<1x65xf32, #tpu.memory_space<vmem>>, vector<1x65xf32>
    %21 = vector.broadcast %20 : vector<1x65xf32> to vector<8x65xf32>
    %22 = arith.addf %19, %21 : vector<8x65xf32>
    %c0_17 = arith.constant 0 : index
    %c0_18 = arith.constant 0 : index
    %23 = vector.load %arg8[%c0_17, %c0_18] : memref<8x65xf32, #tpu.memory_space<vmem>>, vector<8x65xf32>
    tpu.vector_store %arg8[%c0_17, %c0_18], %22 {strides = array<i32>} : memref<8x65xf32, #tpu.memory_space<vmem>>, vector<8x65xf32>,
    return
  }
  func.func @transform_0(%arg0: i32) -> (i32, i32) {
    %c0_i32 = arith.constant 0 : i32
    %c0_i32_0 = arith.constant 0 : i32
    return %arg0, %c0_i32 : i32, i32
  }
  func.func @transform_1(%arg0: i32) -> (i32, i32) {
    %c0_i32 = arith.constant 0 : i32
    %c0_i32_0 = arith.constant 0 : i32
    %c0_i32_1 = arith.constant 0 : i32
    return %c0_i32, %c0_i32_0 : i32, i32
  }
  func.func @transform_2(%arg0: i32) -> (i32, i32) {
    %c0_i32 = arith.constant 0 : i32
    %c0_i32_0 = arith.constant 0 : i32
    %c0_i32_1 = arith.constant 0 : i32
    return %c0_i32, %c0_i32_0 : i32, i32
  }
  func.func @transform_3(%arg0: i32) -> (i32, i32) {
    %c0_i32 = arith.constant 0 : i32
    %c0_i32_0 = arith.constant 0 : i32
    %c0_i32_1 = arith.constant 0 : i32
    return %c0_i32, %c0_i32_0 : i32, i32
  }
  func.func @transform_4(%arg0: i32) -> (i32, i32) {
    %c0_i32 = arith.constant 0 : i32
    %c0_i32_0 = arith.constant 0 : i32
    %c0_i32_1 = arith.constant 0 : i32
    return %c0_i32, %c0_i32_0 : i32, i32
  }
  func.func @transform_5(%arg0: i32) -> (i32, i32) {
    %c0_i32 = arith.constant 0 : i32
    %c0_i32_0 = arith.constant 0 : i32
    %c0_i32_1 = arith.constant 0 : i32
    return %c0_i32, %c0_i32_0 : i32, i32
  }
  func.func @transform_6(%arg0: i32) -> (i32, i32) {
    %c0_i32 = arith.constant 0 : i32
    %c0_i32_0 = arith.constant 0 : i32
    %c0_i32_1 = arith.constant 0 : i32
    return %c0_i32, %c0_i32_0 : i32, i32
  }
  func.func @transform_7(%arg0: i32) -> (i32, i32) {
    %c0_i32 = arith.constant 0 : i32
    %c0_i32_0 = arith.constant 0 : i32
    return %arg0, %c0_i32 : i32, i32
  }
}

</mosaic_0001>

<llo_original>
// kernel: tpu_custom_call.1
$region0: #{tpu_custom_call.1}
  #allocation0 [shape = 'u32[]', space=smem, size = 0x4, offset = 0x4, fixed_abs, tag = 'smem constant byte address 0x4 - core index']
  #allocation1 [shape = 'u32[144,128]{1,0:T(1,128)}', space=vmem, size = 0x12000, scoped, tag = 'internal scratch']
  %s0 = inlined_call_operand.vmem [shape: f32[8,68], index: 0, kind: input, shape index: {}]
  %s1 = inlined_call_operand.vmem [shape: bf16[68,128], index: 1, kind: input, shape index: {}]
  %s2 = inlined_call_operand.vmem [shape: f32[1,128], index: 2, kind: input, shape index: {}]
  %s3 = inlined_call_operand.vmem [shape: bf16[128,64], index: 3, kind: input, shape index: {}]
  %s4 = inlined_call_operand.vmem [shape: f32[1,64], index: 4, kind: input, shape index: {}]
  %s5 = inlined_call_operand.vmem [shape: bf16[64,65], index: 5, kind: input, shape index: {}]
  %s6 = inlined_call_operand.vmem [shape: f32[1,65], index: 6, kind: input, shape index: {}]
  %s7 = inlined_call_operand.hbm [shape: f32[8,65], index: 7, kind: output, shape index: {}]
  %s8 = sld [smem:[#allocation0]]
  $region38: #{tpu_custom_call.1} parent=0
    _
  %s10 = ssub.s32 1, %s8
  %s11 = scalar_select 0, %s10, %s8
  $region1: #{tpu_custom_call.1} parent=0
    #allocation2 [shape = 'u8[4096]{0}', space=vmem, size = 0x1000, scoped, tag = 'output window, operand 0, single buffered']
    #allocation3 [shape = 's32[1]{0}', space=sflag, size = 0x4, scoped, tag = 'scoped memory for tpu_custom_call.1']
    %12 = vsyncpa [#allocation3], 0
    // Predicated region
    $region2: #{tpu_custom_call.1} parent=1 // pred_check
      _
    $region3: #{tpu_custom_call.1} parent=1 // pred_check_branch
      %14 = sbr.rel (0) target = $region5
    $region4: #{tpu_custom_call.1} parent=1 // pred_region
      _
    $region5: #{tpu_custom_call.1} parent=1 // pred_fallthru
      _
    // Predicated region
    $region6: #{tpu_custom_call.1} parent=1 // pred_check
      _
    $region7: #{tpu_custom_call.1} parent=1 // pred_check_branch
      %16 = sbr.rel (0) target = $region9
    $region8: #{tpu_custom_call.1} parent=1 // pred_region
      _
    $region9: #{tpu_custom_call.1} parent=1 // pred_fallthru
      _
    // Predicated region
    $region10: #{tpu_custom_call.1} parent=1 // pred_check
      _
    $region11: #{tpu_custom_call.1} parent=1 // pred_check_branch
      %18 = sbr.rel (0) target = $region13
    $region12: #{tpu_custom_call.1} parent=1 // pred_region
      _
    $region13: #{tpu_custom_call.1} parent=1 // pred_fallthru
      _
    // Predicated region
    $region14: #{tpu_custom_call.1} parent=1 // pred_check
      _
    $region15: #{tpu_custom_call.1} parent=1 // pred_check_branch
      %20 = sbr.rel (0) target = $region17
    $region16: #{tpu_custom_call.1} parent=1 // pred_region
      _
    $region17: #{tpu_custom_call.1} parent=1 // pred_fallthru
      _
    // Predicated region
    $region18: #{tpu_custom_call.1} parent=1 // pred_check
      _
    $region19: #{tpu_custom_call.1} parent=1 // pred_check_branch
      %22 = sbr.rel (0) target = $region21
    $region20: #{tpu_custom_call.1} parent=1 // pred_region
      _
    $region21: #{tpu_custom_call.1} parent=1 // pred_fallthru
      _
    // Predicated region
    $region22: #{tpu_custom_call.1} parent=1 // pred_check
      _
    $region23: #{tpu_custom_call.1} parent=1 // pred_check_branch
      %24 = sbr.rel (0) target = $region25
    $region24: #{tpu_custom_call.1} parent=1 // pred_region
      _
    $region25: #{tpu_custom_call.1} parent=1 // pred_fallthru
      _
    // Predicated region
    $region26: #{tpu_custom_call.1} parent=1 // pred_check
      _
    $region27: #{tpu_custom_call.1} parent=1 // pred_check_branch
      %26 = sbr.rel (0) target = $region29
    $region28: #{tpu_custom_call.1} parent=1 // pred_region
      _
    $region29: #{tpu_custom_call.1} parent=1 // pred_fallthru
      _
    %v28 = vld [vmem:[%s0] sm:$0xff]
    %v29 = vpack.c.bf16 %v28, %v28
    %v30 = vld [vmem:[%s1] sm:$0xf]
    %v31 = vld [vmem:[%s1 + $0x4] sm:$0xf]
    %v32 = vld [vmem:[%s1 + $0x8] sm:$0xf]
    %v33 = vld [vmem:[%s1 + $0xc] sm:$0xf]
    %v34 = vld [vmem:[%s1 + $0x10] sm:$0xf]
    %v35 = vld [vmem:[%s1 + $0x14] sm:$0xf]
    %v36 = vld [vmem:[%s1 + $0x18] sm:$0xf]
    %v37 = vld [vmem:[%s1 + $0x1c] sm:$0xf]
    %v38 = vld [vmem:[%s1 + $0x20] sm:$0x3]
    %v39 = vld [vmem:[%s2] sm:$0x1]
    %v41 = vlaneseq
    %v42 = vshrl.u32 %v41, 7
    %v43 = vsub.s32 0, %v42
    %v44 = vrot.slane %v39, %v43
    %v55 = vunpack.c.l.b16 %v30
    %v56 = vunpack.c.l.b16 %v31
    %v57 = vunpack.c.l.b16 %v32
    %v58 = vunpack.c.l.b16 %v33
    %v59 = vunpack.c.l.b16 %v34
    %v60 = vunpack.c.l.b16 %v35
    %v61 = vunpack.c.l.b16 %v36
    %v62 = vunpack.c.l.b16 %v37
    %v63 = vunpack.c.l.b16 %v38
    %v64 = vpack.c.b16 %v56, %v55
    %v65 = vpack.c.b16 %v58, %v57
    %v66 = vpack.c.b16 %v60, %v59
    %v67 = vpack.c.b16 %v62, %v61
    %v68 = vpack.c.b16 %v63, %v63
    %vm73 = vcmask 556032
    %v75 = vsel %vm73, %v29, 0
    %vm77 = vcmask 1041408
    %v79 = vsel %vm77, %v68, 0
    %81 = vmatprep.subr.bf16.mxu0 0
    %82 = vmatpush1.bf16.msra.mxu0 %v64
    %83 = vmatprep.subr.bf16.mxu0 0
    %84 = vmatpush1.bf16.msra.mxu0 %v65
    %85 = vmatprep.subr.bf16.mxu0 0
    %86 = vmatpush1.bf16.msra.mxu0 %v66
    %87 = vmatprep.subr.bf16.mxu0 0
    %88 = vmatpush1.bf16.msra.mxu0 %v67
    %89 = vmatprep.subr.bf16.mxu0 0
    %90 = vmatpush1.bf16.msra.mxu0 %v79
    %91 = vmatprep.subr.bf16.mxu0 0
    %92 = vmatpush1.bf16.msra.mxu0 0
    %93 = vmatprep.subr.bf16.mxu0 0
    %94 = vmatpush1.bf16.msra.mxu0 0
    %95 = vmatprep.subr.bf16.mxu0 0
    %96 = vmatpush1.bf16.msra.mxu0 0
    %97 = vmatprep.subr.bf16.mxu0 0
    %98 = vmatpush1.bf16.msra.mxu0 0
    %99 = vmatprep.subr.bf16.mxu0 0
    %100 = vmatpush1.bf16.msra.mxu0 0
    %101 = vmatprep.subr.bf16.mxu0 0
    %102 = vmatpush1.bf16.msra.mxu0 0
    %103 = vmatprep.subr.bf16.mxu0 0
    %104 = vmatpush1.bf16.msra.mxu0 0
    %105 = vmatprep.subr.bf16.mxu0 0
    %106 = vmatpush1.bf16.msra.mxu0 0
    %107 = vmatprep.subr.bf16.mxu0 0
    %108 = vmatpush1.bf16.msra.mxu0 0
    %109 = vmatprep.subr.bf16.mxu0 0
    %110 = vmatpush1.bf16.msra.mxu0 0
    %111 = vmatprep.subr.bf16.mxu0 0
    %112 = vmatpush1.bf16.msra.mxu0 0
    %113 = vmatprep.mubr.bf16.mxu0 0
    %114 = vmatmul.mubr.bf16.gmra.mrb[0].mxu0 %v75
    %v115 = vpop.f32.mrb[0].mxu0
    %v116 = vadd.f32 %v44, %v115
    %v117 = vpop.f32.mrb[0].mxu0
    %v118 = vpop.f32.mrb[0].mxu0
    %v119 = vpop.f32.mrb[0].mxu0
    %120 = vdwg.mxu0
    %v121 = vmax.f32 %v116, 0.0
    %v122 = vpack.c.bf16 %v121, %v121
    %v123 = vld [vmem:[%s3] sm:$0xf]
    %v124 = vld [vmem:[%s3 + $0x4] sm:$0xf]
    %v125 = vld [vmem:[%s3 + $0x8] sm:$0xf]
    %v126 = vld [vmem:[%s3 + $0xc] sm:$0xf]
    %v127 = vld [vmem:[%s3 + $0x10] sm:$0xf]
    %v128 = vld [vmem:[%s3 + $0x14] sm:$0xf]
    %v129 = vld [vmem:[%s3 + $0x18] sm:$0xf]
    %v130 = vld [vmem:[%s3 + $0x1c] sm:$0xf]
    %v131 = vld [vmem:[%s3 + $0x20] sm:$0xf]
    %v132 = vld [vmem:[%s3 + $0x24] sm:$0xf]
    %v133 = vld [vmem:[%s3 + $0x28] sm:$0xf]
    %v134 = vld [vmem:[%s3 + $0x2c] sm:$0xf]
    %v135 = vld [vmem:[%s3 + $0x30] sm:$0xf]
    %v136 = vld [vmem:[%s3 + $0x34] sm:$0xf]
    %v137 = vld [vmem:[%s3 + $0x38] sm:$0xf]
    %v138 = vld [vmem:[%s3 + $0x3c] sm:$0xf]
    %v139 = vld [vmem:[%s4] sm:$0x1]
    %v141 = vlaneseq
    %v142 = vshrl.u32 %v141, 7
    %v143 = vsub.s32 0, %v142
    %v144 = vrot.slane %v139, %v143
    %v162 = vunpack.c.l.b16 %v123
    %v163 = vunpack.c.l.b16 %v124
    %v164 = vunpack.c.l.b16 %v125
    %v165 = vunpack.c.l.b16 %v126
    %v166 = vunpack.c.l.b16 %v127
    %v167 = vunpack.c.l.b16 %v128
    %v168 = vunpack.c.l.b16 %v129
    %v169 = vunpack.c.l.b16 %v130
    %v170 = vunpack.c.l.b16 %v131
    %v171 = vunpack.c.l.b16 %v132
    %v172 = vunpack.c.l.b16 %v133
    %v173 = vunpack.c.l.b16 %v134
    %v174 = vunpack.c.l.b16 %v135
    %v175 = vunpack.c.l.b16 %v136
    %v176 = vunpack.c.l.b16 %v137
    %v177 = vunpack.c.l.b16 %v138
    %v178 = vpack.c.b16 %v163, %v162
    %v179 = vpack.c.b16 %v165, %v164
    %v180 = vpack.c.b16 %v167, %v166
    %v181 = vpack.c.b16 %v169, %v168
    %v182 = vpack.c.b16 %v171, %v170
    %v183 = vpack.c.b16 %v173, %v172
    %v184 = vpack.c.b16 %v175, %v174
    %v185 = vpack.c.b16 %v177, %v176
    %194 = vmatprep.subr.bf16.mxu0 0
    %195 = vmatpush1.bf16.msra.mxu0 %v178
    %196 = vmatprep.subr.bf16.mxu0 0
    %197 = vmatpush1.bf16.msra.mxu0 %v179
    %198 = vmatprep.subr.bf16.mxu0 0
    %199 = vmatpush1.bf16.msra.mxu0 %v180
    %200 = vmatprep.subr.bf16.mxu0 0
    %201 = vmatpush1.bf16.msra.mxu0 %v181
    %202 = vmatprep.subr.bf16.mxu0 0
    %203 = vmatpush1.bf16.msra.mxu0 %v182
    %204 = vmatprep.subr.bf16.mxu0 0
    %205 = vmatpush1.bf16.msra.mxu0 %v183
    %206 = vmatprep.subr.bf16.mxu0 0
    %207 = vmatpush1.bf16.msra.mxu0 %v184
    %208 = vmatprep.subr.bf16.mxu0 0
    %209 = vmatpush1.bf16.msra.mxu0 %v185
    %210 = vmatprep.subr.bf16.mxu0 0
    %211 = vmatpush1.bf16.msra.mxu0 0
    %212 = vmatprep.subr.bf16.mxu0 0
    %213 = vmatpush1.bf16.msra.mxu0 0
    %214 = vmatprep.subr.bf16.mxu0 0
    %215 = vmatpush1.bf16.msra.mxu0 0
    %216 = vmatprep.subr.bf16.mxu0 0
    %217 = vmatpush1.bf16.msra.mxu0 0
    %218 = vmatprep.subr.bf16.mxu0 0
    %219 = vmatpush1.bf16.msra.mxu0 0
    %220 = vmatprep.subr.bf16.mxu0 0
    %221 = vmatpush1.bf16.msra.mxu0 0
    %222 = vmatprep.subr.bf16.mxu0 0
    %223 = vmatpush1.bf16.msra.mxu0 0
    %224 = vmatprep.subr.bf16.mxu0 0
    %225 = vmatpush1.bf16.msra.mxu0 0
    %226 = vmatprep.mubr.bf16.mxu0 0
    %227 = vmatmul.mubr.bf16.gmra.mrb[0].mxu0 %v122
    %v228 = vpop.f32.mrb[0].mxu0
    %v229 = vadd.f32 %v144, %v228
    %v230 = vpop.f32.mrb[0].mxu0
    %v231 = vpop.f32.mrb[0].mxu0
    %v232 = vpop.f32.mrb[0].mxu0
    %233 = vdwg.mxu0
    %v234 = vmax.f32 %v229, 0.0
    %v235 = vpack.c.bf16 %v234, %v234
    %v236 = vld [vmem:[%s5] sm:$0xf]
    %v237 = vld [vmem:[%s5 + $0x4] sm:$0xf]
    %v238 = vld [vmem:[%s5 + $0x8] sm:$0xf]
    %v239 = vld [vmem:[%s5 + $0xc] sm:$0xf]
    %v240 = vld [vmem:[%s5 + $0x10] sm:$0xf]
    %v241 = vld [vmem:[%s5 + $0x14] sm:$0xf]
    %v242 = vld [vmem:[%s5 + $0x18] sm:$0xf]
    %v243 = vld [vmem:[%s5 + $0x1c] sm:$0xf]
    %v244 = vld [vmem:[%s6] sm:$0x1]
    %v246 = vlaneseq
    %v247 = vshrl.u32 %v246, 7
    %v248 = vsub.s32 0, %v247
    %v249 = vrot.slane %v244, %v248
    %v259 = vunpack.c.l.b16 %v236
    %v260 = vunpack.c.l.b16 %v237
    %v261 = vunpack.c.l.b16 %v238
    %v262 = vunpack.c.l.b16 %v239
    %v263 = vunpack.c.l.b16 %v240
    %v264 = vunpack.c.l.b16 %v241
    %v265 = vunpack.c.l.b16 %v242
    %v266 = vunpack.c.l.b16 %v243
    %v267 = vpack.c.b16 %v260, %v259
    %v268 = vpack.c.b16 %v262, %v261
    %v269 = vpack.c.b16 %v264, %v263
    %v270 = vpack.c.b16 %v266, %v265
    %vm275 = vcmask 523264
    %v277 = vsel %vm275, %v235, 0
    %279 = vmatprep.subr.bf16.mxu0 0
    %280 = vmatpush1.bf16.msra.mxu0 %v267
    %281 = vmatprep.subr.bf16.mxu0 0
    %282 = vmatpush1.bf16.msra.mxu0 %v268
    %283 = vmatprep.subr.bf16.mxu0 0
    %284 = vmatpush1.bf16.msra.mxu0 %v269
    %285 = vmatprep.subr.bf16.mxu0 0
    %286 = vmatpush1.bf16.msra.mxu0 %v270
    %287 = vmatprep.subr.bf16.mxu0 0
    %288 = vmatpush1.bf16.msra.mxu0 0
    %289 = vmatprep.subr.bf16.mxu0 0
    %290 = vmatpush1.bf16.msra.mxu0 0
    %291 = vmatprep.subr.bf16.mxu0 0
    %292 = vmatpush1.bf16.msra.mxu0 0
    %293 = vmatprep.subr.bf16.mxu0 0
    %294 = vmatpush1.bf16.msra.mxu0 0
    %295 = vmatprep.subr.bf16.mxu0 0
    %296 = vmatpush1.bf16.msra.mxu0 0
    %297 = vmatprep.subr.bf16.mxu0 0
    %298 = vmatpush1.bf16.msra.mxu0 0
    %299 = vmatprep.subr.bf16.mxu0 0
    %300 = vmatpush1.bf16.msra.mxu0 0
    %301 = vmatprep.subr.bf16.mxu0 0
    %302 = vmatpush1.bf16.msra.mxu0 0
    %303 = vmatprep.subr.bf16.mxu0 0
    %304 = vmatpush1.bf16.msra.mxu0 0
    %305 = vmatprep.subr.bf16.mxu0 0
    %306 = vmatpush1.bf16.msra.mxu0 0
    %307 = vmatprep.subr.bf16.mxu0 0
    %308 = vmatpush1.bf16.msra.mxu0 0
    %309 = vmatprep.subr.bf16.mxu0 0
    %310 = vmatpush1.bf16.msra.mxu0 0
    %311 = vmatprep.mubr.bf16.mxu0 0
    %312 = vmatmul.mubr.bf16.gmra.mrb[0].mxu0 %v277
    %v313 = vpop.f32.mrb[0].mxu0
    %v314 = vadd.f32 %v249, %v313
    %v315 = vpop.f32.mrb[0].mxu0
    %v316 = vpop.f32.mrb[0].mxu0
    %v317 = vpop.f32.mrb[0].mxu0
    %318 = vdwg.mxu0
    %vm319 = vcmask 531456
    %320 = vst.msk [vmem:[#allocation2] sm:$0xff] %vm319, %v314
    // Predicated region
    $region30: #{tpu_custom_call.1} parent=1 // pred_check
      _
    $region31: #{tpu_custom_call.1} parent=1 // pred_check_branch
      %322 = sbr.rel (0) target = $region33
    $region32: #{tpu_custom_call.1} parent=1 // pred_region
      %s324 = ssub.s32 128, 128
      %325 = vsyncadd [#allocation3], %s324
      %s327 = sshll.u32 [#allocation2], 4
      %s328 = int_to_ptr.vmem [resolvable:$true] %s327
      %330 = dma.vmem_to_hbm [thread:$0]  %s328, 128, %s7, [#allocation3]
    $region33: #{tpu_custom_call.1} parent=1 // pred_fallthru
      _
    // Predicated region
    $region34: #{tpu_custom_call.1} parent=1 // pred_check
      _
    $region35: #{tpu_custom_call.1} parent=1 // pred_check_branch
      %332 = sbr.rel (0) target = $region37
    $region36: #{tpu_custom_call.1} parent=1 // pred_region
      %333 = dma.done [#allocation3], 128
    $region37: #{tpu_custom_call.1} parent=1 // pred_fallthru
      _
    %334 = vsyncpa [#allocation3], 1

</llo_original>
